<compile_context>
chip_gen: v5e
topology: v5e:2x2
jax: 0.10.0
libtpu: 0.0.40
codegen_flags: <defaults>
</compile_context>

<pallas_src>
from typing import NamedTuple

import jax
import jax.numpy as jnp
from jax.experimental import pallas as pl
from jax.experimental.pallas import tpu as pltpu


_VMEM_LIMIT_BYTES = 32 * 1024 * 1024  # safe on v5e/v6e (128 MiB) and v7x (64 MiB)


def _round_up(x, m):
    return (x + m - 1) // m * m


def _pick_tile(padded_dim, preferred, align):
    """Largest multiple of `align` that is <= preferred and divides padded_dim."""
    if padded_dim <= preferred:
        return padded_dim
    t = (preferred // align) * align
    while t > align and padded_dim % t:
        t -= align
    return t


class LinearParams(NamedTuple):
    w_kn: jax.Array        # (Kp, Np) compute-dtype, pre-transposed + pre-padded
    bias: jax.Array        # (1, Np) float32, pre-padded
    in_features: int       # K
    out_features: int      # N
    kp: int                # padded K
    np_padded: int         # padded N
    tk: int                # K tile (== kp when the reduction axis is collapsed)


def prepare_linear_params(weight, bias, *, compute_dtype=jnp.bfloat16):
    """One-time parameter prep (outside the per-call hot path).

    Transposes the PyTorch (N, K) weight to MXU-native (K, N), zero-pads K/N to
    lane/sublane-friendly sizes, and casts to the compute dtype (bf16 by
    default; pass jnp.float32 for strict-accuracy callers)."""
    N, K = weight.shape
    if K <= 2048:
        Kp = _round_up(K, 128)
        tk = Kp                      # whole K in one block -> no reduction grid axis
    else:
        Kp = _round_up(K, 512)
        tk = 512
    Np = _round_up(N, 128)
    w_kn = jnp.pad(weight.T, ((0, Kp - K), (0, Np - N))).astype(compute_dtype)
    b_p = jnp.pad(bias.astype(jnp.float32), (0, Np - N)).reshape(1, Np)
    return LinearParams(w_kn, b_p, K, N, Kp, Np, tk)


def _linear_block_kernel(x_ref, w_ref, b_ref, o_ref):
    # x:(tm, Kp) bf16   w:(Kp, tn) bf16   b:(1, tn) f32   o:(tm, tn) f32
    # MXU-native (K, N) RHS: standard (1,0) contraction, f32 accumulation,
    # bias added once, single unmasked lane-dense store per tile.
    o_ref[...] = jnp.dot(x_ref[...], w_ref[...],
                         preferred_element_type=jnp.float32) + b_ref[...]


def _linear_kred_kernel(x_ref, w_ref, b_ref, o_ref):
    # K is the innermost (resident reduction) grid axis.  The f32 output
    # block's index map is invariant in k, so it stays in VMEM across the
    # reduction -- accumulate into it directly (no scratch, no finalize copy).
    k = pl.program_id(2)

    @pl.when(k == 0)
    def _():
        o_ref[...] = jnp.broadcast_to(b_ref[...], o_ref.shape)

    o_ref[...] += jnp.dot(x_ref[...], w_ref[...],
                          preferred_element_type=jnp.float32)


def linear_forward(x, params: LinearParams, *, tm_pref=256, tn_pref=512):
    """Pallas equivalent of torch.nn.Linear.forward: y = x @ W^T + b."""
    M, K = x.shape
    assert K == params.in_features, "in_features mismatch"
    Kp, Np, tk = params.kp, params.np_padded, params.tk
    out_dtype = x.dtype
    compute_dtype = params.w_kn.dtype
    sub = 16 if compute_dtype == jnp.bfloat16 else 8

    x_c = x.astype(compute_dtype)

    single_block = (M <= 512) and (Np <= 512) and (Kp <= 2048)

    if single_block:
        # Whole problem in one VMEM block: no grid, no pipeline bookkeeping.
        Mp = _round_up(M, sub)
        x_p = jnp.pad(x_c, ((0, Mp - M), (0, Kp - K))) if (Mp, Kp) != (M, K) else x_c
        y_p = pl.pallas_call(
            _linear_block_kernel,
            out_shape=jax.ShapeDtypeStruct((Mp, Np), jnp.float32),
            in_specs=[pl.BlockSpec(memory_space=pltpu.MemorySpace.VMEM)] * 3,
            out_specs=pl.BlockSpec(memory_space=pltpu.MemorySpace.VMEM),
            compiler_params=pltpu.CompilerParams(
                vmem_limit_bytes=_VMEM_LIMIT_BYTES),
        )(x_p, params.w_kn, params.bias)
    else:
        tm = _round_up(M, sub) if M <= 512 else tm_pref
        Mp = _round_up(M, tm)
        tn = _pick_tile(Np, tn_pref, 128)
        # v7x has 2 TensorCores sharded over the parallel axes: keep >= 2 blocks.
        if (Mp // tm) * (Np // tn) < 2 and Np >= 256:
            tn = _pick_tile(Np, max(128, tn // 2), 128)
        x_p = jnp.pad(x_c, ((0, Mp - M), (0, Kp - K))) if (Mp, Kp) != (M, K) else x_c

        if tk == Kp:
            # K collapsed: each output tile computed and stored exactly once.
            grid = (Mp // tm, Np // tn)
            y_p = pl.pallas_call(
                _linear_block_kernel,
                out_shape=jax.ShapeDtypeStruct((Mp, Np), jnp.float32),
                grid=grid,
                in_specs=[
                    pl.BlockSpec((tm, Kp), lambda i, j: (i, 0)),
                    pl.BlockSpec((Kp, tn), lambda i, j: (0, j)),
                    pl.BlockSpec((1, tn), lambda i, j: (0, j)),
                ],
                out_specs=pl.BlockSpec((tm, tn), lambda i, j: (i, j)),
                compiler_params=pltpu.CompilerParams(
                    dimension_semantics=("parallel", "parallel"),
                    vmem_limit_bytes=_VMEM_LIMIT_BYTES),
            )(x_p, params.w_kn, params.bias)
        else:
            # Large K: innermost reduction axis, accumulate into the f32 output.
            grid = (Mp // tm, Np // tn, Kp // tk)
            y_p = pl.pallas_call(
                _linear_kred_kernel,
                out_shape=jax.ShapeDtypeStruct((Mp, Np), jnp.float32),
                grid=grid,
                in_specs=[
                    pl.BlockSpec((tm, tk), lambda i, j, k: (i, k)),
                    pl.BlockSpec((tk, tn), lambda i, j, k: (k, j)),
                    # Bias block index invariant in k -> not re-DMA'd per k-step.
                    pl.BlockSpec((1, tn), lambda i, j, k: (0, j)),
                ],
                out_specs=pl.BlockSpec((tm, tn), lambda i, j, k: (i, j)),
                compiler_params=pltpu.CompilerParams(
                    dimension_semantics=("parallel", "parallel", "arbitrary"),
                    vmem_limit_bytes=_VMEM_LIMIT_BYTES),
            )(x_p, params.w_kn, params.bias)

    y = y_p[:M, :params.out_features].astype(out_dtype)
    # Mirrors the PyTorch module's print; under jit this fires at trace time
    # only (shapes are static, numerics unaffected).
    print("\tIn Model: input size", tuple(x.shape), "output size", tuple(y.shape))
    return y


if __name__ == "__main__":
    # Model(input_size=32, output_size=16), small batch -- single-block path.
    batch, input_size, output_size = 8, 32, 16

    key = jax.random.PRNGKey(0)
    kx, kw, kb = jax.random.split(key, 3)
    x = jax.random.normal(kx, (batch, input_size), dtype=jnp.float32)
    bound = 1.0 / jnp.sqrt(jnp.float32(input_size))
    weight = jax.random.uniform(kw, (output_size, input_size), dtype=jnp.float32,
                                minval=-bound, maxval=bound)
    bias = jax.random.uniform(kb, (output_size,), dtype=jnp.float32,
                              minval=-bound, maxval=bound)

    params = prepare_linear_params(weight, bias)            # one-time prep
    y = jax.block_until_ready(linear_forward(x, params))

    # Reference with the same bf16-operand / f32-accumulate math as the kernel,
    # plus a looser drift check against the pure-f32 nn.Linear reference.
    xb = x.astype(jnp.bfloat16).astype(jnp.float32)
    wb = weight.astype(jnp.bfloat16).astype(jnp.float32)
    y_ref_bf16 = xb @ wb.T + bias
    y_ref_f32 = x @ weight.T + bias
    assert jnp.allclose(y, y_ref_bf16, atol=1e-4, rtol=1e-4), "mismatch vs bf16 reference (small)"
    assert jnp.allclose(y, y_ref_f32, atol=5e-2, rtol=5e-2), "excessive drift vs f32 reference (small)"

    # Exercise the tiled K-reduction path once (K > 2048 -> tk=512, 3-D grid).
    key2 = jax.random.PRNGKey(1)
    k2x, k2w, k2b = jax.random.split(key2, 3)
    M2, K2, N2 = 256, 2560, 768
    x2 = jax.random.normal(k2x, (M2, K2), dtype=jnp.float32)
    bound2 = 1.0 / jnp.sqrt(jnp.float32(K2))
    w2 = jax.random.uniform(k2w, (N2, K2), dtype=jnp.float32, minval=-bound2, maxval=bound2)
    b2 = jax.random.uniform(k2b, (N2,), dtype=jnp.float32, minval=-bound2, maxval=bound2)

    params2 = prepare_linear_params(w2, b2)
    y2 = jax.block_until_ready(linear_forward(x2, params2))

    x2b = x2.astype(jnp.bfloat16).astype(jnp.float32)
    w2b = w2.astype(jnp.bfloat16).astype(jnp.float32)
    y2_ref_bf16 = x2b @ w2b.T + b2
    assert jnp.allclose(y2, y2_ref_bf16, atol=2e-3, rtol=2e-3), "mismatch vs bf16 reference (tiled)"

    print("KERNEL_OK")
</pallas_src>

<mosaic_0001>
module attributes {stable_mosaic.version = 11 : i64} {
  func.func @_linear_block_kernel(%arg0: memref<16x128xbf16, #tpu.memory_space<vmem>>, %arg1: memref<128x128xbf16, #tpu.memory_space<vmem>>, %arg2: memref<1x128xf32, #tpu.memory_space<vmem>>, %arg3: memref<16x128xf32, #tpu.memory_space<vmem>>) attributes {dimension_semantics = [], scalar_prefetch = 0 : i64, scratch_operands = 0 : i64, tpu.core_type = #tpu.core_type<tc>} {
    %c0 = arith.constant 0 : index
    %c0_0 = arith.constant 0 : index
    %0 = vector.load %arg0[%c0, %c0_0] : memref<16x128xbf16, #tpu.memory_space<vmem>>, vector<16x128xbf16>
    %c0_1 = arith.constant 0 : index
    %c0_2 = arith.constant 0 : index
    %1 = vector.load %arg1[%c0_1, %c0_2] : memref<128x128xbf16, #tpu.memory_space<vmem>>, vector<128x128xbf16>
    %cst = arith.constant dense<0.000000e+00> : vector<16x128xf32>
    %2 = tpu.matmul %0, %1, %cst {dimension_numbers = #tpu.dot_dimension_numbers<[1], [0], [0], [1], [0, 0, 1, 1], [], []>} : vector<16x128xbf16>, vector<128x128xbf16>, vector<16x128xf32> -> vector<16x128xf32>
    %c0_3 = arith.constant 0 : index
    %c0_4 = arith.constant 0 : index
    %3 = vector.load %arg2[%c0_3, %c0_4] : memref<1x128xf32, #tpu.memory_space<vmem>>, vector<1x128xf32>
    %4 = vector.broadcast %3 : vector<1x128xf32> to vector<16x128xf32>
    %5 = arith.addf %2, %4 : vector<16x128xf32>
    %c0_5 = arith.constant 0 : index
    %c0_6 = arith.constant 0 : index
    %6 = vector.load %arg3[%c0_5, %c0_6] : memref<16x128xf32, #tpu.memory_space<vmem>>, vector<16x128xf32>
    tpu.vector_store %arg3[%c0_5, %c0_6], %5 {strides = array<i32>} : memref<16x128xf32, #tpu.memory_space<vmem>>, vector<16x128xf32>,
    return
  }
}

</mosaic_0001>

<llo_original>
// kernel: tpu_custom_call.1
$region0: #{tpu_custom_call.1}
  #allocation0 [shape = 'u32[]', space=smem, size = 0x4, offset = 0x4, fixed_abs, tag = 'smem constant byte address 0x4 - core index']
  #allocation1 [shape = 'u32[72,128]{1,0:T(1,128)}', space=vmem, size = 0x9000, scoped, tag = 'internal scratch']
  %s0 = inlined_call_operand.hbm [shape: bf16[16,128], index: 0, kind: input, shape index: {}]
  %s1 = inlined_call_operand.hbm [shape: bf16[128,128], index: 1, kind: input, shape index: {}]
  %s2 = inlined_call_operand.vmem [shape: f32[1,128], index: 2, kind: input, shape index: {}]
  %s3 = inlined_call_operand.hbm [shape: f32[16,128], index: 3, kind: output, shape index: {}]
  %s4 = sld [smem:[#allocation0]]
  $region30: #{tpu_custom_call.1} parent=0
    _
  %s6 = ssub.s32 1, %s4
  %s7 = scalar_select 0, %s6, %s4
  $region1: #{tpu_custom_call.1} parent=0
    #allocation2 [shape = 'u8[4096]{0}', space=vmem, size = 0x1000, scoped, tag = 'input window, operand 0, single buffered']
    #allocation3 [shape = 's32[1]{0}', space=sflag, size = 0x4, scoped, tag = 'scoped memory for tpu_custom_call.1']
    #allocation4 [shape = 's32[1]{0}', space=sflag, size = 0x4, scoped, tag = 'scoped memory for tpu_custom_call.1']
    #allocation5 [shape = 'u8[32768]{0}', space=vmem, size = 0x8000, scoped, tag = 'input window, operand 1, single buffered']
    #allocation6 [shape = 's32[1]{0}', space=sflag, size = 0x4, scoped, tag = 'scoped memory for tpu_custom_call.1']
    #allocation7 [shape = 'u8[8192]{0}', space=vmem, size = 0x2000, scoped, tag = 'output window, operand 0, single buffered']
    %8 = vsyncpa [#allocation3], 0
    %9 = vsyncpa [#allocation6], 0
    %10 = vsyncpa [#allocation4], 0
    // Predicated region
    $region2: #{tpu_custom_call.1} parent=1 // pred_check
      _
    $region3: #{tpu_custom_call.1} parent=1 // pred_check_branch
      %12 = sbr.rel (0) target = $region5
    $region4: #{tpu_custom_call.1} parent=1 // pred_region
      %14 = vsyncadd [#allocation3], 0
      %s15 = sshll.u32 %s0, 4
      %s16 = int_to_ptr.hbm [resolvable:$true] %s15
      %s17 = sshll.u32 [#allocation2], 4
      %s18 = int_to_ptr.vmem [resolvable:$true] %s17
      %23 = dma.hbm_to_vmem [thread:$0]  %s16, 128, %s18, [#allocation3], 64, 64, 4
    $region5: #{tpu_custom_call.1} parent=1 // pred_fallthru
      _
    // Predicated region
    $region6: #{tpu_custom_call.1} parent=1 // pred_check
      _
    $region7: #{tpu_custom_call.1} parent=1 // pred_check_branch
      %25 = sbr.rel (0) target = $region9
    $region8: #{tpu_custom_call.1} parent=1 // pred_region
      %27 = vsyncadd [#allocation6], 0
      %s28 = sshll.u32 %s1, 4
      %s29 = int_to_ptr.hbm [resolvable:$true] %s28
      %s30 = sshll.u32 [#allocation5], 4
      %s31 = int_to_ptr.vmem [resolvable:$true] %s30
      %36 = dma.hbm_to_vmem [thread:$0]  %s29, 1024, %s31, [#allocation6], 64, 64, 4
    $region9: #{tpu_custom_call.1} parent=1 // pred_fallthru
      _
    // Predicated region
    $region10: #{tpu_custom_call.1} parent=1 // pred_check
      _
    $region11: #{tpu_custom_call.1} parent=1 // pred_check_branch
      %38 = sbr.rel (0) target = $region13
    $region12: #{tpu_custom_call.1} parent=1 // pred_region
      _
    $region13: #{tpu_custom_call.1} parent=1 // pred_fallthru
      _
    // Predicated region
    $region14: #{tpu_custom_call.1} parent=1 // pred_check
      _
    $region15: #{tpu_custom_call.1} parent=1 // pred_check_branch
      %40 = sbr.rel (0) target = $region17
    $region16: #{tpu_custom_call.1} parent=1 // pred_region
      %42 = dma.done [#allocation3], 128
    $region17: #{tpu_custom_call.1} parent=1 // pred_fallthru
      _
    // Predicated region
    $region18: #{tpu_custom_call.1} parent=1 // pred_check
      _
    $region19: #{tpu_custom_call.1} parent=1 // pred_check_branch
      %44 = sbr.rel (0) target = $region21
    $region20: #{tpu_custom_call.1} parent=1 // pred_region
      %46 = dma.done [#allocation6], 1024
    $region21: #{tpu_custom_call.1} parent=1 // pred_fallthru
      _
    %v47 = vld [vmem:[#allocation2] sm:$0xf]
    %v48 = vld [vmem:[#allocation2 + $0x4] sm:$0xf]
    %v49 = vld [vmem:[#allocation5] sm:$0xf]
    %v50 = vld [vmem:[#allocation5 + $0x4] sm:$0xf]
    %v51 = vld [vmem:[#allocation5 + $0x8] sm:$0xf]
    %v52 = vld [vmem:[#allocation5 + $0xc] sm:$0xf]
    %v53 = vld [vmem:[#allocation5 + $0x10] sm:$0xf]
    %v54 = vld [vmem:[#allocation5 + $0x14] sm:$0xf]
    %v55 = vld [vmem:[#allocation5 + $0x18] sm:$0xf]
    %v56 = vld [vmem:[#allocation5 + $0x1c] sm:$0xf]
    %v57 = vld [vmem:[#allocation5 + $0x20] sm:$0xf]
    %v58 = vld [vmem:[#allocation5 + $0x24] sm:$0xf]
    %v59 = vld [vmem:[#allocation5 + $0x28] sm:$0xf]
    %v60 = vld [vmem:[#allocation5 + $0x2c] sm:$0xf]
    %v61 = vld [vmem:[#allocation5 + $0x30] sm:$0xf]
    %v62 = vld [vmem:[#allocation5 + $0x34] sm:$0xf]
    %v63 = vld [vmem:[#allocation5 + $0x38] sm:$0xf]
    %v64 = vld [vmem:[#allocation5 + $0x3c] sm:$0xf]
    %v65 = vld [vmem:[%s2] sm:$0x1]
    %v67 = vperm.slane %v65, 0
    %v71 = vunpack.c.l.b16 %v47
    %v72 = vunpack.c.l.b16 %v48
    %v73 = vpack.c.b16 %v72, %v71
    %v91 = vunpack.c.l.b16 %v49
    %v92 = vunpack.c.l.b16 %v50
    %v93 = vunpack.c.l.b16 %v51
    %v94 = vunpack.c.l.b16 %v52
    %v95 = vunpack.c.l.b16 %v53
    %v96 = vunpack.c.l.b16 %v54
    %v97 = vunpack.c.l.b16 %v55
    %v98 = vunpack.c.l.b16 %v56
    %v99 = vunpack.c.l.b16 %v57
    %v100 = vunpack.c.l.b16 %v58
    %v101 = vunpack.c.l.b16 %v59
    %v102 = vunpack.c.l.b16 %v60
    %v103 = vunpack.c.l.b16 %v61
    %v104 = vunpack.c.l.b16 %v62
    %v105 = vunpack.c.l.b16 %v63
    %v106 = vunpack.c.l.b16 %v64
    %v107 = vpack.c.b16 %v92, %v91
    %v108 = vpack.c.b16 %v94, %v93
    %v109 = vpack.c.b16 %v96, %v95
    %v110 = vpack.c.b16 %v98, %v97
    %v111 = vpack.c.b16 %v100, %v99
    %v112 = vpack.c.b16 %v102, %v101
    %v113 = vpack.c.b16 %v104, %v103
    %v114 = vpack.c.b16 %v106, %v105
    %123 = vmatpush.bf16.msra.mxu0 %v114
    %124 = vmatpush.bf16.msra.mxu0 %v113
    %125 = vmatpush.bf16.msra.mxu0 %v112
    %126 = vmatpush.bf16.msra.mxu0 %v111
    %127 = vmatpush.bf16.msra.mxu0 %v110
    %128 = vmatpush.bf16.msra.mxu0 %v109
    %129 = vmatpush.bf16.msra.mxu0 %v108
    %130 = vmatpush.bf16.msra.mxu0 %v107
    %131 = vmatmul.bf16.gmra.mxu0 %v73
    %v132 = vpop.f32.mrf.mxu0
    %v133 = vadd.f32 %v67, %v132
    %v134 = vpop.f32.mrf.mxu0
    %v135 = vadd.f32 %v67, %v134
    %136 = vdwg.mxu0
    %137 = vst [vmem:[#allocation7] sm:$0xff] %v133
    %138 = vst [vmem:[#allocation7 + $0x8] sm:$0xff] %v135
    // Predicated region
    $region22: #{tpu_custom_call.1} parent=1 // pred_check
      _
    $region23: #{tpu_custom_call.1} parent=1 // pred_check_branch
      %140 = sbr.rel (0) target = $region25
    $region24: #{tpu_custom_call.1} parent=1 // pred_region
      %142 = vsyncadd [#allocation4], 0
      %s143 = sshll.u32 [#allocation7], 4
      %s144 = int_to_ptr.vmem [resolvable:$true] %s143
      %s145 = sshll.u32 %s3, 4
      %s146 = int_to_ptr.hbm [resolvable:$true] %s145
      %151 = dma.vmem_to_hbm [thread:$0]  %s144, 256, %s146, [#allocation4], 128, 128, 8
    $region25: #{tpu_custom_call.1} parent=1 // pred_fallthru
      _
    // Predicated region
    $region26: #{tpu_custom_call.1} parent=1 // pred_check
      _
    $region27: #{tpu_custom_call.1} parent=1 // pred_check_branch
      %153 = sbr.rel (0) target = $region29
    $region28: #{tpu_custom_call.1} parent=1 // pred_region
      %155 = dma.done [#allocation4], 256
    $region29: #{tpu_custom_call.1} parent=1 // pred_fallthru
      _
    %156 = vsyncpa [#allocation3], 1
    %157 = vsyncpa [#allocation6], 1
    %158 = vsyncpa [#allocation4], 1

</llo_original>
